<compile_context>
chip_gen: v7x
topology: tpu7x:2x2x1
jax: 0.10.0
libtpu: 0.0.40
codegen_flags: <defaults>
</compile_context>

<pallas_src>
import functools

import jax
import jax.numpy as jnp
from jax import lax
from jax.experimental import pallas as pl
from jax.experimental.pallas import tpu as pltpu

_LANES = 128
_SUBLANES = 8


def _wbce_elementwise(x, t, pos_weight, neg_weight, hard_targets=False):
    """Per-element weighted BCE (f32), matching PyTorch's -100 log clamp."""
    x = x.astype(jnp.float32)
    t = t.astype(jnp.float32)
    pw = jnp.float32(pos_weight)
    nw = jnp.float32(neg_weight)
    if hard_targets:
        # Fast path for t in {0, 1}: one transcendental per element.
        pos = t >= 0.5
        logp = jnp.maximum(jnp.log(jnp.where(pos, x, 1.0 - x)), -100.0)
        w = jnp.where(pos, pw, nw)
        return -logp * w
    log_x = jnp.maximum(jnp.log(x), -100.0)
    log_1mx = jnp.maximum(jnp.log(1.0 - x), -100.0)
    bce = -(t * log_x + (1.0 - t) * log_1mx)
    w = t * pw + (1.0 - t) * nw
    return bce * w


def _wbce_partial_kernel(x_ref, t_ref, out_ref, *, pos_weight, neg_weight,
                         hard_targets, total_rows, block_rows, chunk_rows,
                         need_mask):
    """Folds one (block_rows,128) tile into an (8,128) f32 partial sum."""
    n_chunks = block_rows // chunk_rows

    def tile_sum(masked):
        def body(k, acc):
            r0 = pl.multiple_of(k * chunk_rows, _SUBLANES)
            xv = x_ref[pl.ds(r0, chunk_rows), :]
            tv = t_ref[pl.ds(r0, chunk_rows), :]
            val = _wbce_elementwise(xv, tv, pos_weight, neg_weight, hard_targets)
            if masked:
                # int32 row index: fine for < 2^31 rows (> 2.7e11 elements).
                row = (pl.program_id(0) * block_rows + r0
                       + lax.broadcasted_iota(jnp.int32, val.shape, 0))
                val = jnp.where(row < total_rows, val, 0.0)
            return acc + val

        acc = lax.fori_loop(0, n_chunks, body,
                            jnp.zeros((chunk_rows, _LANES), jnp.float32),
                            unroll=min(4, n_chunks))

        # Fold (chunk_rows,128) -> (8,128) with a couple of vreg-granular VPU adds.
        parts = [acc[j * _SUBLANES:(j + 1) * _SUBLANES, :]
                 for j in range(chunk_rows // _SUBLANES)]
        while len(parts) > 1:
            nxt = [a + b for a, b in zip(parts[0::2], parts[1::2])]
            if len(parts) % 2:
                nxt.append(parts[-1])
            parts = nxt
        out_ref[...] = parts[0]

    if need_mask:
        last = pl.num_programs(0) - 1

        @pl.when(pl.program_id(0) == last)
        def _():
            tile_sum(masked=True)

        @pl.when(pl.program_id(0) != last)
        def _():
            tile_sum(masked=False)
    else:
        tile_sum(masked=False)


def weighted_binary_cross_entropy(x, target, pos_weight=2.0, neg_weight=1.0, *,
                                  hard_targets=False, block_rows=2048):
    """x, target: same shape, probabilities in [0, 1]. Returns scalar mean loss (f32)."""
    assert x.shape == target.shape
    n = x.size
    assert n > 0

    x_flat = x.reshape(-1)        # zero-copy for a contiguous array
    t_flat = target.reshape(-1)

    # Sub-32-bit inputs (bf16/fp16/int8) are streamed natively; they just need a
    # coarser sublane multiple for the block shape.
    sub = _SUBLANES if (x.dtype.itemsize >= 4 and target.dtype.itemsize >= 4) else 32

    rem = n % _LANES              # lane remainder (< 128 elements)
    main = n - rem
    rows = main // _LANES

    total = jnp.float32(0.0)
    tail_start = 0

    if rows >= sub:
        if rem:
            # Only taken when n % 128 != 0 (not the case for typical NCHW sizes or
            # the demo). XLA may materialize this slice as one extra HBM pass.
            x_main, t_main = x_flat[:main], t_flat[:main]
        else:
            x_main, t_main = x_flat, t_flat

        x2d = x_main.reshape(rows, _LANES)
        t2d = t_main.reshape(rows, _LANES)

        # Biggest requested tile that fits the array, rounded down to the sublane
        # multiple (so the block never exceeds the array and stays layout-legal).
        br = max(sub, (min(int(block_rows), rows) // sub) * sub)
        if br % 32 == 0:
            chunk = 32
        elif br % 16 == 0:
            chunk = 16
        else:
            chunk = _SUBLANES
        num_tiles = (rows + br - 1) // br
        need_mask = (rows % br) != 0

        kernel = functools.partial(
            _wbce_partial_kernel,
            pos_weight=float(pos_weight),
            neg_weight=float(neg_weight),
            hard_targets=bool(hard_targets),
            total_rows=rows,
            block_rows=br,
            chunk_rows=chunk,
            need_mask=need_mask,
        )

        def _run(dim_sem):
            return pl.pallas_call(
                kernel,
                out_shape=jax.ShapeDtypeStruct((num_tiles * _SUBLANES, _LANES),
                                               jnp.float32),
                grid_spec=pltpu.PrefetchScalarGridSpec(
                    num_scalar_prefetch=0,
                    grid=(num_tiles,),
                    in_specs=[
                        pl.BlockSpec((br, _LANES), lambda i: (i, 0)),
                        pl.BlockSpec((br, _LANES), lambda i: (i, 0)),
                    ],
                    out_specs=pl.BlockSpec((_SUBLANES, _LANES), lambda i: (i, 0)),
                ),
                compiler_params=pltpu.CompilerParams(
                    dimension_semantics=dim_sem),
            )(x2d, t2d)

        # v7x: CORE_PARALLEL genuinely shards the independent grid axis across both
        # TensorCores (~2x streaming bandwidth). Fall back where it is rejected.
        try:
            partials = _run((pltpu.CORE_PARALLEL,))
        except Exception:
            partials = _run(("parallel",))

        total = total + jnp.sum(partials, dtype=jnp.float32)
        tail_start = main

    if tail_start < n:
        # Tiny tail (< 128 elements, or an input smaller than one tile): plain jnp.
        total = total + jnp.sum(
            _wbce_elementwise(x_flat[tail_start:], t_flat[tail_start:],
                              pos_weight, neg_weight, hard_targets),
            dtype=jnp.float32,
        )

    return total / jnp.float32(n)


def _reference(x, target, pos_weight=2.0, neg_weight=1.0):
    return jnp.mean(_wbce_elementwise(x, target, pos_weight, neg_weight))


if __name__ == "__main__":
    key = jax.random.PRNGKey(0)
    k1, k2 = jax.random.split(key)

    # NCHW, small shapes: batch=2, channels=4, spatial=16x16
    shape = (2, 4, 16, 16)
    # "input" are probabilities (post-sigmoid), "target" are binary labels
    x = jax.nn.sigmoid(jax.random.normal(k1, shape, dtype=jnp.float32))
    target = (jax.random.uniform(k2, shape) > 0.5).astype(jnp.float32)

    ref = _reference(x, target, 2.0, 1.0)

    # Default (exact PyTorch semantics incl. soft targets).
    loss = weighted_binary_cross_entropy(x, target, pos_weight=2.0, neg_weight=1.0)
    loss = jax.block_until_ready(loss)
    assert jnp.allclose(loss, ref, rtol=1e-5, atol=1e-5), (loss, ref)

    # Optional single-log fast path (valid here because the demo targets are hard).
    loss_hard = weighted_binary_cross_entropy(x, target, 2.0, 1.0, hard_targets=True)
    loss_hard = jax.block_until_ready(loss_hard)
    assert jnp.allclose(loss_hard, ref, rtol=1e-5, atol=1e-5), (loss_hard, ref)

    print("KERNEL_OK")
</pallas_src>

<mosaic_0001>
module attributes {stable_mosaic.version = 11 : i64} {
  func.func @_wbce_partial_kernel(%arg0: i32, %arg1: memref<16x128xf32, #tpu.memory_space<vmem>>, %arg2: memref<16x128xf32, #tpu.memory_space<vmem>>, %arg3: memref<8x128xf32, #tpu.memory_space<vmem>>) attributes {dimension_semantics = [#tpu.dimension_semantics<core_parallel>], iteration_bounds = array<i64: 1>, scalar_prefetch = 0 : i64, scratch_operands = 0 : i64, tpu.core_type = #tpu.core_type<tc>, window_params = [{transform_indices = @transform_0, window_bounds = array<i64: 16, 128>}, {transform_indices = @transform_1, window_bounds = array<i64: 16, 128>}, {transform_indices = @transform_2, window_bounds = array<i64: 8, 128>}]} {
    %cst = arith.constant 0.000000e+00 : f32
    %0 = vector.broadcast %cst : f32 to vector<16x128xf32>
    %c0_i32 = arith.constant 0 : i32
    %c16_i32 = arith.constant 16 : i32
    %1 = arith.muli %c0_i32, %c16_i32 : i32
    %2 = tpu.assume_multiple %1, 8 : i32
    %3 = arith.index_cast %2 : i32 to index
    %c0 = arith.constant 0 : index
    %4 = vector.load %arg1[%3, %c0] : memref<16x128xf32, #tpu.memory_space<vmem>>, vector<16x128xf32>
    %5 = arith.index_cast %2 : i32 to index
    %c0_0 = arith.constant 0 : index
    %6 = vector.load %arg2[%5, %c0_0] : memref<16x128xf32, #tpu.memory_space<vmem>>, vector<16x128xf32>
    %7 = math.log %4 : vector<16x128xf32>
    %cst_1 = arith.constant -1.000000e+02 : f32
    %8 = vector.broadcast %cst_1 : f32 to vector<16x128xf32>
    %9 = arith.maximumf %7, %8 : vector<16x128xf32>
    %cst_2 = arith.constant 1.000000e+00 : f32
    %10 = vector.broadcast %cst_2 : f32 to vector<16x128xf32>
    %11 = arith.subf %10, %4 : vector<16x128xf32>
    %12 = math.log %11 : vector<16x128xf32>
    %cst_3 = arith.constant -1.000000e+02 : f32
    %13 = vector.broadcast %cst_3 : f32 to vector<16x128xf32>
    %14 = arith.maximumf %12, %13 : vector<16x128xf32>
    %15 = arith.mulf %6, %9 : vector<16x128xf32>
    %cst_4 = arith.constant 1.000000e+00 : f32
    %16 = vector.broadcast %cst_4 : f32 to vector<16x128xf32>
    %17 = arith.subf %16, %6 : vector<16x128xf32>
    %18 = arith.mulf %17, %14 : vector<16x128xf32>
    %19 = arith.addf %15, %18 : vector<16x128xf32>
    %cst_5 = arith.constant 0.000000e+00 : f32
    %20 = vector.broadcast %cst_5 : f32 to vector<16x128xf32>
    %21 = arith.subf %20, %19 : vector<16x128xf32>
    %cst_6 = arith.constant 2.000000e+00 : f32
    %22 = vector.broadcast %cst_6 : f32 to vector<16x128xf32>
    %23 = arith.mulf %6, %22 : vector<16x128xf32>
    %cst_7 = arith.constant 1.000000e+00 : f32
    %24 = vector.broadcast %cst_7 : f32 to vector<16x128xf32>
    %25 = arith.subf %24, %6 : vector<16x128xf32>
    %cst_8 = arith.constant 1.000000e+00 : f32
    %26 = vector.broadcast %cst_8 : f32 to vector<16x128xf32>
    %27 = arith.mulf %25, %26 : vector<16x128xf32>
    %28 = arith.addf %23, %27 : vector<16x128xf32>
    %29 = arith.mulf %21, %28 : vector<16x128xf32>
    %30 = arith.addf %0, %29 : vector<16x128xf32>
    %c1_i32 = arith.constant 1 : i32
    %31 = vector.extract_strided_slice %30 {offsets = [0, 0], sizes = [8, 128], strides = [1, 1]} : vector<16x128xf32> to vector<8x128xf32>
    %32 = vector.extract_strided_slice %30 {offsets = [8, 0], sizes = [8, 128], strides = [1, 1]} : vector<16x128xf32> to vector<8x128xf32>
    %33 = arith.addf %31, %32 : vector<8x128xf32>
    %c0_9 = arith.constant 0 : index
    %c0_10 = arith.constant 0 : index
    %34 = vector.load %arg3[%c0_9, %c0_10] : memref<8x128xf32, #tpu.memory_space<vmem>>, vector<8x128xf32>
    tpu.vector_store %arg3[%c0_9, %c0_10], %33 {strides = array<i32>} : memref<8x128xf32, #tpu.memory_space<vmem>>, vector<8x128xf32>,
    return
  }
  func.func @transform_0(%arg0: i32) -> (i32, i32) {
    %c0_i32 = arith.constant 0 : i32
    %c0_i32_0 = arith.constant 0 : i32
    return %arg0, %c0_i32 : i32, i32
  }
  func.func @transform_1(%arg0: i32) -> (i32, i32) {
    %c0_i32 = arith.constant 0 : i32
    %c0_i32_0 = arith.constant 0 : i32
    return %arg0, %c0_i32 : i32, i32
  }
  func.func @transform_2(%arg0: i32) -> (i32, i32) {
    %c0_i32 = arith.constant 0 : i32
    %c0_i32_0 = arith.constant 0 : i32
    return %arg0, %c0_i32 : i32, i32
  }
}

module attributes {stable_mosaic.version = 11 : i64} {
  func.func @_wbce_partial_kernel(%arg0: i32, %arg1: memref<16x128xf32, #tpu.memory_space<vmem>>, %arg2: memref<16x128xf32, #tpu.memory_space<vmem>>, %arg3: memref<8x128xf32, #tpu.memory_space<vmem>>) attributes {dimension_semantics = [#tpu.dimension_semantics<parallel>], iteration_bounds = array<i64: 1>, scalar_prefetch = 0 : i64, scratch_operands = 0 : i64, tpu.core_type = #tpu.core_type<tc>, window_params = [{transform_indices = @transform_0, window_bounds = array<i64: 16, 128>}, {transform_indices = @transform_1, window_bounds = array<i64: 16, 128>}, {transform_indices = @transform_2, window_bounds = array<i64: 8, 128>}]} {
    %cst = arith.constant 0.000000e+00 : f32
    %0 = vector.broadcast %cst : f32 to vector<16x128xf32>
    %c0_i32 = arith.constant 0 : i32
    %c16_i32 = arith.constant 16 : i32
    %1 = arith.muli %c0_i32, %c16_i32 : i32
    %2 = tpu.assume_multiple %1, 8 : i32
    %3 = arith.index_cast %2 : i32 to index
    %c0 = arith.constant 0 : index
    %4 = vector.load %arg1[%3, %c0] : memref<16x128xf32, #tpu.memory_space<vmem>>, vector<16x128xf32>
    %5 = arith.index_cast %2 : i32 to index
    %c0_0 = arith.constant 0 : index
    %6 = vector.load %arg2[%5, %c0_0] : memref<16x128xf32, #tpu.memory_space<vmem>>, vector<16x128xf32>
    %7 = math.log %4 : vector<16x128xf32>
    %cst_1 = arith.constant -1.000000e+02 : f32
    %8 = vector.broadcast %cst_1 : f32 to vector<16x128xf32>
    %9 = arith.maximumf %7, %8 : vector<16x128xf32>
    %cst_2 = arith.constant 1.000000e+00 : f32
    %10 = vector.broadcast %cst_2 : f32 to vector<16x128xf32>
    %11 = arith.subf %10, %4 : vector<16x128xf32>
    %12 = math.log %11 : vector<16x128xf32>
    %cst_3 = arith.constant -1.000000e+02 : f32
    %13 = vector.broadcast %cst_3 : f32 to vector<16x128xf32>
    %14 = arith.maximumf %12, %13 : vector<16x128xf32>
    %15 = arith.mulf %6, %9 : vector<16x128xf32>
    %cst_4 = arith.constant 1.000000e+00 : f32
    %16 = vector.broadcast %cst_4 : f32 to vector<16x128xf32>
    %17 = arith.subf %16, %6 : vector<16x128xf32>
    %18 = arith.mulf %17, %14 : vector<16x128xf32>
    %19 = arith.addf %15, %18 : vector<16x128xf32>
    %cst_5 = arith.constant 0.000000e+00 : f32
    %20 = vector.broadcast %cst_5 : f32 to vector<16x128xf32>
    %21 = arith.subf %20, %19 : vector<16x128xf32>
    %cst_6 = arith.constant 2.000000e+00 : f32
    %22 = vector.broadcast %cst_6 : f32 to vector<16x128xf32>
    %23 = arith.mulf %6, %22 : vector<16x128xf32>
    %cst_7 = arith.constant 1.000000e+00 : f32
    %24 = vector.broadcast %cst_7 : f32 to vector<16x128xf32>
    %25 = arith.subf %24, %6 : vector<16x128xf32>
    %cst_8 = arith.constant 1.000000e+00 : f32
    %26 = vector.broadcast %cst_8 : f32 to vector<16x128xf32>
    %27 = arith.mulf %25, %26 : vector<16x128xf32>
    %28 = arith.addf %23, %27 : vector<16x128xf32>
    %29 = arith.mulf %21, %28 : vector<16x128xf32>
    %30 = arith.addf %0, %29 : vector<16x128xf32>
    %c1_i32 = arith.constant 1 : i32
    %31 = vector.extract_strided_slice %30 {offsets = [0, 0], sizes = [8, 128], strides = [1, 1]} : vector<16x128xf32> to vector<8x128xf32>
    %32 = vector.extract_strided_slice %30 {offsets = [8, 0], sizes = [8, 128], strides = [1, 1]} : vector<16x128xf32> to vector<8x128xf32>
    %33 = arith.addf %31, %32 : vector<8x128xf32>
    %c0_9 = arith.constant 0 : index
    %c0_10 = arith.constant 0 : index
    %34 = vector.load %arg3[%c0_9, %c0_10] : memref<8x128xf32, #tpu.memory_space<vmem>>, vector<8x128xf32>
    tpu.vector_store %arg3[%c0_9, %c0_10], %33 {strides = array<i32>} : memref<8x128xf32, #tpu.memory_space<vmem>>, vector<8x128xf32>,
    return
  }
  func.func @transform_0(%arg0: i32) -> (i32, i32) {
    %c0_i32 = arith.constant 0 : i32
    %c0_i32_0 = arith.constant 0 : i32
    return %arg0, %c0_i32 : i32, i32
  }
  func.func @transform_1(%arg0: i32) -> (i32, i32) {
    %c0_i32 = arith.constant 0 : i32
    %c0_i32_0 = arith.constant 0 : i32
    return %arg0, %c0_i32 : i32, i32
  }
  func.func @transform_2(%arg0: i32) -> (i32, i32) {
    %c0_i32 = arith.constant 0 : i32
    %c0_i32_0 = arith.constant 0 : i32
    return %arg0, %c0_i32 : i32, i32
  }
}

</mosaic_0001>

<llo_original>
// kernel: tpu_custom_call.1
$region0: #{tpu_custom_call.1}
  #allocation0 [shape = 'u32[]', space=smem, size = 0x4, offset = 0x4, fixed_abs, tag = 'smem constant byte address 0x4 - core index']
  #allocation1 [shape = 'u32[144,128]{1,0:T(1,128)}', space=vmem, size = 0x12000, scoped, tag = 'internal scratch']
  %s0 = inlined_call_operand.hbm [shape: f32[16,128], index: 0, kind: input, shape index: {}]
  %s1 = inlined_call_operand.hbm [shape: f32[16,128], index: 1, kind: input, shape index: {}]
  %s2 = inlined_call_operand.hbm [shape: f32[8,128], index: 2, kind: output, shape index: {}]
  %s3 = sld [smem:[#allocation0]]
  $region26: #{tpu_custom_call.1} parent=0
    _
  %s5 = ssub.s32 1, %s3
  %s6 = scalar_select 0, %s5, %s3
  $region1: #{tpu_custom_call.1} parent=0
    #allocation2 [shape = 'u8[8192]{0}', space=vmem, size = 0x2000, scoped, tag = 'input window, operand 0, single buffered']
    #allocation3 [shape = 's32[1]{0}', space=sflag, size = 0x4, scoped, tag = 'scoped memory for tpu_custom_call.1']
    #allocation4 [shape = 's32[1]{0}', space=sflag, size = 0x4, scoped, tag = 'scoped memory for tpu_custom_call.1']
    #allocation5 [shape = 'u8[8192]{0}', space=vmem, size = 0x2000, scoped, tag = 'input window, operand 1, single buffered']
    #allocation6 [shape = 's32[1]{0}', space=sflag, size = 0x4, scoped, tag = 'scoped memory for tpu_custom_call.1']
    #allocation7 [shape = 'u8[4096]{0}', space=vmem, size = 0x1000, scoped, tag = 'output window, operand 0, single buffered']
    %7 = vsyncpa [#allocation3], 0
    %8 = vsyncpa [#allocation6], 0
    %9 = vsyncpa [#allocation4], 0
    // Predicated region
    $region2: #{tpu_custom_call.1} parent=1 // pred_check
      _
    $region3: #{tpu_custom_call.1} parent=1 // pred_check_branch
      %11 = sbr.rel (0) target = $region5
    $region4: #{tpu_custom_call.1} parent=1 // pred_region
      %s12 = smul.u32 2, %s6
      %s14 = ssub.s32 256, 256
      %15 = vsyncadd [#allocation3], %s14
      %s16 = smul.addr %s12, 128
      %s17 = scalar_lea.hbm %s0, %s16
      %s18 = sshll.u32 [#allocation2], 4
      %s19 = int_to_ptr.vmem [resolvable:$true] %s18
      %24 = dma.hbm_to_vmem [thread:$0]  %s17, 256, %s19, [#allocation3], 128, 128, 8
    $region5: #{tpu_custom_call.1} parent=1 // pred_fallthru
      _
    // Predicated region
    $region6: #{tpu_custom_call.1} parent=1 // pred_check
      _
    $region7: #{tpu_custom_call.1} parent=1 // pred_check_branch
      %26 = sbr.rel (0) target = $region9
    $region8: #{tpu_custom_call.1} parent=1 // pred_region
      %s27 = smul.u32 2, %s6
      %s29 = ssub.s32 256, 256
      %30 = vsyncadd [#allocation6], %s29
      %s31 = smul.addr %s27, 128
      %s32 = scalar_lea.hbm %s1, %s31
      %s33 = sshll.u32 [#allocation5], 4
      %s34 = int_to_ptr.vmem [resolvable:$true] %s33
      %39 = dma.hbm_to_vmem [thread:$0]  %s32, 256, %s34, [#allocation6], 128, 128, 8
    $region9: #{tpu_custom_call.1} parent=1 // pred_fallthru
      _
    // Predicated region
    $region10: #{tpu_custom_call.1} parent=1 // pred_check
      _
    $region11: #{tpu_custom_call.1} parent=1 // pred_check_branch
      %41 = sbr.rel (0) target = $region13
    $region12: #{tpu_custom_call.1} parent=1 // pred_region
      %42 = dma.done [#allocation3], 256
    $region13: #{tpu_custom_call.1} parent=1 // pred_fallthru
      _
    // Predicated region
    $region14: #{tpu_custom_call.1} parent=1 // pred_check
      _
    $region15: #{tpu_custom_call.1} parent=1 // pred_check_branch
      %44 = sbr.rel (0) target = $region17
    $region16: #{tpu_custom_call.1} parent=1 // pred_region
      %45 = dma.done [#allocation6], 256
    $region17: #{tpu_custom_call.1} parent=1 // pred_fallthru
      _
    %s46 = smul.u32 2, %s6
    %s47 = smul.u32 2, %s6
    %v48 = vld [vmem:[#allocation2] sm:$0xff]
    %v49 = vld [vmem:[#allocation2 + $0x8] sm:$0xff]
    %v50 = vld [vmem:[#allocation5] sm:$0xff]
    %v51 = vld [vmem:[#allocation5 + $0x8] sm:$0xff]
    %v52 = vlog2.pop %v48
    %v53 = vmul.f32 %v52, 0.6931472
    %v54 = vlog2.pop %v49
    %v55 = vmul.f32 %v54, 0.6931472
    %v56 = vmax.f32 %v53, -100.0
    %v57 = vmax.f32 %v55, -100.0
    %v58 = vsub.f32 1.0, %v48
    %v59 = vsub.f32 1.0, %v49
    %v60 = vlog2.pop %v58
    %v61 = vmul.f32 %v60, 0.6931472
    %v62 = vlog2.pop %v59
    %v63 = vmul.f32 %v62, 0.6931472
    %v64 = vmax.f32 %v61, -100.0
    %v65 = vmax.f32 %v63, -100.0
    %v66 = vmul.f32 %v50, %v56
    %v67 = vmul.f32 %v51, %v57
    %v68 = vsub.f32 1.0, %v50
    %v69 = vsub.f32 1.0, %v51
    %v70 = vmul.f32 %v68, %v64
    %v71 = vmul.f32 %v69, %v65
    %v72 = vadd.f32 %v66, %v70
    %v73 = vadd.f32 %v67, %v71
    %v74 = vsub.f32 0.0, %v72
    %v75 = vsub.f32 0.0, %v73
    %v76 = vmul.f32 %v50, 2.0
    %v77 = vmul.f32 %v51, 2.0
    %v78 = vadd.f32 %v76, %v68
    %v79 = vadd.f32 %v77, %v69
    %v80 = vmul.f32 %v74, %v78
    %v81 = vmul.f32 %v75, %v79
    %v82 = vadd.f32 %v80, 0.0
    %v83 = vadd.f32 %v81, 0.0
    %v84 = vadd.f32 %v82, %v83
    %85 = vst [vmem:[#allocation7] sm:$0xff] %v84
    // Predicated region
    $region18: #{tpu_custom_call.1} parent=1 // pred_check
      _
    $region19: #{tpu_custom_call.1} parent=1 // pred_check_branch
      %87 = sbr.rel (0) target = $region21
    $region20: #{tpu_custom_call.1} parent=1 // pred_region
      %s89 = ssub.s32 128, 128
      %90 = vsyncadd [#allocation4], %s89
      %s91 = smul.addr %s6, 128
      %s92 = scalar_lea.hbm %s2, %s91
      %s94 = sshll.u32 [#allocation7], 4
      %s95 = int_to_ptr.vmem [resolvable:$true] %s94
      %97 = dma.vmem_to_hbm [thread:$0]  %s95, 128, %s92, [#allocation4]
    $region21: #{tpu_custom_call.1} parent=1 // pred_fallthru
      _
    // Predicated region
    $region22: #{tpu_custom_call.1} parent=1 // pred_check
      _
    $region23: #{tpu_custom_call.1} parent=1 // pred_check_branch
      %99 = sbr.rel (0) target = $region25
    $region24: #{tpu_custom_call.1} parent=1 // pred_region
      %100 = dma.done [#allocation4], 128
    $region25: #{tpu_custom_call.1} parent=1 // pred_fallthru
      _
    %101 = vsyncpa [#allocation3], 1
    %102 = vsyncpa [#allocation6], 1
    %103 = vsyncpa [#allocation4], 1

// kernel: tpu_custom_call.1
$region0: #{tpu_custom_call.1}
  #allocation0 [shape = 'u32[]', space=smem, size = 0x4, offset = 0x4, fixed_abs, tag = 'smem constant byte address 0x4 - core index']
  #allocation1 [shape = 'u32[144,128]{1,0:T(1,128)}', space=vmem, size = 0x12000, scoped, tag = 'internal scratch']
  %s0 = inlined_call_operand.hbm [shape: f32[16,128], index: 0, kind: input, shape index: {}]
  %s1 = inlined_call_operand.hbm [shape: f32[16,128], index: 1, kind: input, shape index: {}]
  %s2 = inlined_call_operand.hbm [shape: f32[8,128], index: 2, kind: output, shape index: {}]
  %s3 = sld [smem:[#allocation0]]
  $region26: #{tpu_custom_call.1} parent=0
    _
  %s5 = ssub.s32 1, %s3
  %s6 = scalar_select 0, %s5, %s3
  $region1: #{tpu_custom_call.1} parent=0
    #allocation2 [shape = 'u8[8192]{0}', space=vmem, size = 0x2000, scoped, tag = 'input window, operand 0, single buffered']
    #allocation3 [shape = 's32[1]{0}', space=sflag, size = 0x4, scoped, tag = 'scoped memory for tpu_custom_call.1']
    #allocation4 [shape = 's32[1]{0}', space=sflag, size = 0x4, scoped, tag = 'scoped memory for tpu_custom_call.1']
    #allocation5 [shape = 'u8[8192]{0}', space=vmem, size = 0x2000, scoped, tag = 'input window, operand 1, single buffered']
    #allocation6 [shape = 's32[1]{0}', space=sflag, size = 0x4, scoped, tag = 'scoped memory for tpu_custom_call.1']
    #allocation7 [shape = 'u8[4096]{0}', space=vmem, size = 0x1000, scoped, tag = 'output window, operand 0, single buffered']
    %7 = vsyncpa [#allocation3], 0
    %8 = vsyncpa [#allocation6], 0
    %9 = vsyncpa [#allocation4], 0
    // Predicated region
    $region2: #{tpu_custom_call.1} parent=1 // pred_check
      _
    $region3: #{tpu_custom_call.1} parent=1 // pred_check_branch
      %11 = sbr.rel (0) target = $region5
    $region4: #{tpu_custom_call.1} parent=1 // pred_region
      %s13 = ssub.s32 256, 256
      %14 = vsyncadd [#allocation3], %s13
      %s15 = sshll.u32 [#allocation2], 4
      %s16 = int_to_ptr.vmem [resolvable:$true] %s15
      %21 = dma.hbm_to_vmem [thread:$0]  %s0, 256, %s16, [#allocation3], 128, 128, 8
    $region5: #{tpu_custom_call.1} parent=1 // pred_fallthru
      _
    // Predicated region
    $region6: #{tpu_custom_call.1} parent=1 // pred_check
      _
    $region7: #{tpu_custom_call.1} parent=1 // pred_check_branch
      %23 = sbr.rel (0) target = $region9
    $region8: #{tpu_custom_call.1} parent=1 // pred_region
      %s25 = ssub.s32 256, 256
      %26 = vsyncadd [#allocation6], %s25
      %s27 = sshll.u32 [#allocation5], 4
      %s28 = int_to_ptr.vmem [resolvable:$true] %s27
      %33 = dma.hbm_to_vmem [thread:$0]  %s1, 256, %s28, [#allocation6], 128, 128, 8
    $region9: #{tpu_custom_call.1} parent=1 // pred_fallthru
      _
    // Predicated region
    $region10: #{tpu_custom_call.1} parent=1 // pred_check
      _
    $region11: #{tpu_custom_call.1} parent=1 // pred_check_branch
      %35 = sbr.rel (0) target = $region13
    $region12: #{tpu_custom_call.1} parent=1 // pred_region
      %36 = dma.done [#allocation3], 256
    $region13: #{tpu_custom_call.1} parent=1 // pred_fallthru
      _
    // Predicated region
    $region14: #{tpu_custom_call.1} parent=1 // pred_check
      _
    $region15: #{tpu_custom_call.1} parent=1 // pred_check_branch
      %38 = sbr.rel (0) target = $region17
    $region16: #{tpu_custom_call.1} parent=1 // pred_region
      %39 = dma.done [#allocation6], 256
    $region17: #{tpu_custom_call.1} parent=1 // pred_fallthru
      _
    %v40 = vld [vmem:[#allocation2] sm:$0xff]
    %v41 = vld [vmem:[#allocation2 + $0x8] sm:$0xff]
    %v42 = vld [vmem:[#allocation5] sm:$0xff]
    %v43 = vld [vmem:[#allocation5 + $0x8] sm:$0xff]
    %v44 = vlog2.pop %v40
    %v45 = vmul.f32 %v44, 0.6931472
    %v46 = vlog2.pop %v41
    %v47 = vmul.f32 %v46, 0.6931472
    %v48 = vmax.f32 %v45, -100.0
    %v49 = vmax.f32 %v47, -100.0
    %v50 = vsub.f32 1.0, %v40
    %v51 = vsub.f32 1.0, %v41
    %v52 = vlog2.pop %v50
    %v53 = vmul.f32 %v52, 0.6931472
    %v54 = vlog2.pop %v51
    %v55 = vmul.f32 %v54, 0.6931472
    %v56 = vmax.f32 %v53, -100.0
    %v57 = vmax.f32 %v55, -100.0
    %v58 = vmul.f32 %v42, %v48
    %v59 = vmul.f32 %v43, %v49
    %v60 = vsub.f32 1.0, %v42
    %v61 = vsub.f32 1.0, %v43
    %v62 = vmul.f32 %v60, %v56
    %v63 = vmul.f32 %v61, %v57
    %v64 = vadd.f32 %v58, %v62
    %v65 = vadd.f32 %v59, %v63
    %v66 = vsub.f32 0.0, %v64
    %v67 = vsub.f32 0.0, %v65
    %v68 = vmul.f32 %v42, 2.0
    %v69 = vmul.f32 %v43, 2.0
    %v70 = vadd.f32 %v68, %v60
    %v71 = vadd.f32 %v69, %v61
    %v72 = vmul.f32 %v66, %v70
    %v73 = vmul.f32 %v67, %v71
    %v74 = vadd.f32 %v72, 0.0
    %v75 = vadd.f32 %v73, 0.0
    %v76 = vadd.f32 %v74, %v75
    %77 = vst [vmem:[#allocation7] sm:$0xff] %v76
    // Predicated region
    $region18: #{tpu_custom_call.1} parent=1 // pred_check
      _
    $region19: #{tpu_custom_call.1} parent=1 // pred_check_branch
      %79 = sbr.rel (0) target = $region21
    $region20: #{tpu_custom_call.1} parent=1 // pred_region
      %s81 = ssub.s32 128, 128
      %82 = vsyncadd [#allocation4], %s81
      %s84 = sshll.u32 [#allocation7], 4
      %s85 = int_to_ptr.vmem [resolvable:$true] %s84
      %87 = dma.vmem_to_hbm [thread:$0]  %s85, 128, %s2, [#allocation4]
    $region21: #{tpu_custom_call.1} parent=1 // pred_fallthru
      _
    // Predicated region
    $region22: #{tpu_custom_call.1} parent=1 // pred_check
      _
    $region23: #{tpu_custom_call.1} parent=1 // pred_check_branch
      %89 = sbr.rel (0) target = $region25
    $region24: #{tpu_custom_call.1} parent=1 // pred_region
      %90 = dma.done [#allocation4], 128
    $region25: #{tpu_custom_call.1} parent=1 // pred_fallthru
      _
    %91 = vsyncpa [#allocation3], 1
    %92 = vsyncpa [#allocation6], 1
    %93 = vsyncpa [#allocation4], 1

</llo_original>
